<compile_context>
chip_gen: v5e
topology: v5e:2x2
jax: 0.10.0
libtpu: 0.0.40
codegen_flags: <defaults>
</compile_context>

<pallas_src>
import functools

import jax
import jax.numpy as jnp
from jax.experimental import pallas as pl
from jax.experimental.pallas import tpu as pltpu

BN_EPS = 1e-5
VMEM_LIMIT_BYTES = 48 * 1024 * 1024  # headroom under v7x's 64 MiB physical VMEM


def _conv_stats_kernel(patches_ref, w_ref, y_ref, pstats_ref):
    """Pass 1 (per lane tile): conv matmul + per-tile partial BN statistics.

    patches_ref: (K*C_in, TILE)  im2col patches; padded columns are all-zero.
    w_ref:       (C_out, K*C_in) flattened conv weight (no bias: BN cancels it).
    y_ref:       (C_out, TILE)   channel-major conv output tile (lane-dense store).
    pstats_ref:  (C_out, 2)      this tile's [sum, sum-of-squares] per channel.
    """
    y = jnp.dot(w_ref[...], patches_ref[...], preferred_element_type=jnp.float32)
    y_ref[...] = y.astype(y_ref.dtype)
    # Padded columns are exactly 0, so they contribute nothing to the sums.
    pstats_ref[:, 0:1] = jnp.sum(y, axis=1, keepdims=True)
    pstats_ref[:, 1:2] = jnp.sum(y * y, axis=1, keepdims=True)


def _bn_tanh_kernel(y_ref, ab_ref, o_ref):
    """Pass 2 (per lane tile): folded BatchNorm affine + Tanh.

    y_ref:  (C_out, TILE)  conv output tile.
    ab_ref: (C_out, 2)     columns = [scale, shift] with
                           scale = gamma * rsqrt(var+eps), shift = beta - mean*scale.
    o_ref:  (C_out, TILE)  lane-dense output tile (unmasked full-width vst).
    """
    scale = ab_ref[:, 0:1]
    shift = ab_ref[:, 1:2]
    o_ref[...] = jnp.tanh(y_ref[...] * scale + shift).astype(o_ref.dtype)


def _pick_tile_lanes(kc_in, c_out, lane_min, cap_requested):
    """Lane-tile width: multiple of 128, double-buffered working set fits v7x VMEM."""
    budget = 40 * 1024 * 1024                      # per-call VMEM budget (v7x-safe)
    fixed = 2 * c_out * kc_in * 4                  # weight block (double-buffered)
    per_lane = 2 * (kc_in + 2 * c_out) * 4         # patches + y tiles, double-buffered
    cap_vmem = (max(budget - fixed, 0) // per_lane) // 128 * 128
    cap = max(128, min(cap_requested, cap_vmem, 2048))
    return min(cap, lane_min)


@functools.partial(jax.jit, static_argnames=("padding", "max_tile_lanes"))
def conv_tanh_block(x, weight, bias, gamma, beta, *, padding, max_tile_lanes=2048):
    """x: (N, C_in, L) f32 (NCL, PyTorch convention); weight: (C_out, C_in, K);
       bias/gamma/beta: (C_out,).  Returns (N, C_out, L_out), L_out = L + 2*pad - K + 1.

       NOTE: `bias` is accepted for API parity but unused — train-mode BatchNorm's
       mean subtraction cancels the conv bias exactly, so it never reaches the kernel.
    """
    N, C_in, L = x.shape
    C_out, _, K = weight.shape
    L_out = L + 2 * padding - K + 1
    n_valid = N * L_out

    lane_min = ((n_valid + 127) // 128) * 128
    tile = _pick_tile_lanes(K * C_in, C_out, lane_min, max_tile_lanes)
    L_lane = ((n_valid + tile - 1) // tile) * tile
    num_tiles = L_lane // tile

    # ---- wrapper-side layout plumbing: im2col + lane padding (zeros) ----
    x_pad = jnp.pad(x, ((0, 0), (0, 0), (padding, padding)))               # (N, C_in, L_pad)
    patches = jnp.stack([x_pad[:, :, k:k + L_out] for k in range(K)], axis=0)  # (K,N,C_in,L_out)
    patches = patches.transpose(0, 2, 1, 3).reshape(K * C_in, n_valid)
    patches = jnp.pad(patches, ((0, 0), (0, L_lane - n_valid)))            # (K*C_in, L_lane)

    w_flat = jnp.transpose(weight, (0, 2, 1)).reshape(C_out, K * C_in)     # (C_out, K*C_in)

    # ---- Pass 1: pipelined, parallel conv matmul + per-tile partial stats ----
    y_slab, pstats = pl.pallas_call(
        _conv_stats_kernel,
        grid=(num_tiles,),
        in_specs=[
            pl.BlockSpec((K * C_in, tile), lambda i: (0, i)),
            pl.BlockSpec((C_out, K * C_in), lambda i: (0, 0)),
        ],
        out_specs=(
            pl.BlockSpec((C_out, tile), lambda i: (0, i)),
            pl.BlockSpec((None, C_out, 2), lambda i: (i, 0, 0)),
        ),
        out_shape=(
            jax.ShapeDtypeStruct((C_out, L_lane), jnp.float32),
            jax.ShapeDtypeStruct((num_tiles, C_out, 2), jnp.float32),
        ),
        compiler_params=pltpu.CompilerParams(
            dimension_semantics=("parallel",),
            vmem_limit_bytes=VMEM_LIMIT_BYTES),
    )(patches, w_flat)

    # ---- tiny (C_out,) finalize: batch statistics -> folded scale/shift ----
    stats = jnp.sum(pstats, axis=0)                                        # (C_out, 2)
    inv_n = 1.0 / float(n_valid)
    mean = stats[:, 0] * inv_n
    var = jnp.maximum(stats[:, 1] * inv_n - mean * mean, 0.0)
    scale = gamma * jax.lax.rsqrt(var + BN_EPS)
    shift = beta - mean * scale
    ab = jnp.stack([scale, shift], axis=1).astype(jnp.float32)             # (C_out, 2)

    # ---- Pass 2: pipelined, parallel normalize + tanh ----
    out_slab = pl.pallas_call(
        _bn_tanh_kernel,
        grid=(num_tiles,),
        in_specs=[
            pl.BlockSpec((C_out, tile), lambda i: (0, i)),
            pl.BlockSpec((C_out, 2), lambda i: (0, 0)),
        ],
        out_specs=pl.BlockSpec((C_out, tile), lambda i: (0, i)),
        out_shape=jax.ShapeDtypeStruct((C_out, L_lane), x.dtype),
        compiler_params=pltpu.CompilerParams(
            dimension_semantics=("parallel",),
            vmem_limit_bytes=VMEM_LIMIT_BYTES),
    )(y_slab, ab)

    # Un-plumb: (C_out, N*L_out) -> (N, C_out, L_out)
    return out_slab[:, :n_valid].reshape(C_out, N, L_out).transpose(1, 0, 2)


def _reference(x, weight, bias, gamma, beta, padding):
    """Pure-JAX reference matching PyTorch Conv1d + BatchNorm1d(train) + Tanh."""
    y = jax.lax.conv_general_dilated(
        x, weight, window_strides=(1,), padding=[(padding, padding)],
        dimension_numbers=("NCH", "OIH", "NCH"))
    y = y + bias[None, :, None]
    mean = jnp.mean(y, axis=(0, 2), keepdims=True)
    var = jnp.mean((y - mean) ** 2, axis=(0, 2), keepdims=True)
    y_hat = (y - mean) / jnp.sqrt(var + BN_EPS)
    return jnp.tanh(y_hat * gamma[None, :, None] + beta[None, :, None])


if __name__ == "__main__":
    def run_case(N, C_IN, C_OUT, L, K, PAD, max_tile_lanes, key):
        kx, kw, kb, kg, kbt = jax.random.split(key, 5)
        x = jax.random.normal(kx, (N, C_IN, L), dtype=jnp.float32)
        weight = 0.3 * jax.random.normal(kw, (C_OUT, C_IN, K), dtype=jnp.float32)
        bias = 0.1 * jax.random.normal(kb, (C_OUT,), dtype=jnp.float32)
        gamma = 1.0 + 0.1 * jax.random.normal(kg, (C_OUT,), dtype=jnp.float32)
        beta = 0.1 * jax.random.normal(kbt, (C_OUT,), dtype=jnp.float32)

        out = conv_tanh_block(x, weight, bias, gamma, beta,
                              padding=PAD, max_tile_lanes=max_tile_lanes)
        out = jax.block_until_ready(out)

        ref = _reference(x, weight, bias, gamma, beta, PAD)
        L_out = L + 2 * PAD - K + 1
        assert out.shape == (N, C_OUT, L_out), out.shape
        assert jnp.allclose(out, ref, atol=1e-4, rtol=1e-4), "mismatch vs. reference"

    key = jax.random.PRNGKey(0)
    k1, k2 = jax.random.split(key)
    # Small shape consistent with the module: Conv1d(in=4, out=8, kernel=3, padding=1).
    run_case(2, 4, 8, 16, 3, 1, 2048, k1)
    # Multi-tile path: 128-lane tiles -> 4-step parallel grid with partial-stat reduce.
    run_case(2, 4, 8, 200, 3, 1, 128, k2)

    print("KERNEL_OK")
</pallas_src>

<mosaic_0001>
module attributes {stable_mosaic.version = 11 : i64} {
  func.func @_bn_tanh_kernel(%arg0: i32, %arg1: memref<8x128xf32, #tpu.memory_space<vmem>>, %arg2: memref<8x2xf32, #tpu.memory_space<vmem>>, %arg3: memref<8x128xf32, #tpu.memory_space<vmem>>) attributes {dimension_semantics = [#tpu.dimension_semantics<parallel>], iteration_bounds = array<i64: 1>, scalar_prefetch = 0 : i64, scratch_operands = 0 : i64, tpu.core_type = #tpu.core_type<tc>, window_params = [{transform_indices = @transform_0, window_bounds = array<i64: 8, 128>}, {pipeline_mode = #tpu.pipeline_mode<synchronous>, transform_indices = @transform_1, window_bounds = array<i64: 8, 2>}, {transform_indices = @transform_2, window_bounds = array<i64: 8, 128>}]} {
    %c0 = arith.constant 0 : index
    %c0_0 = arith.constant 0 : index
    %0 = vector.load %arg2[%c0, %c0_0] : memref<8x2xf32, #tpu.memory_space<vmem>>, vector<8x1xf32>
    %c0_1 = arith.constant 0 : index
    %c1 = arith.constant 1 : index
    %1 = vector.load %arg2[%c0_1, %c1] : memref<8x2xf32, #tpu.memory_space<vmem>>, vector<8x1xf32>
    %c0_2 = arith.constant 0 : index
    %c0_3 = arith.constant 0 : index
    %2 = vector.load %arg1[%c0_2, %c0_3] : memref<8x128xf32, #tpu.memory_space<vmem>>, vector<8x128xf32>
    %3 = vector.broadcast %0 : vector<8x1xf32> to vector<8x128xf32>
    %4 = arith.mulf %2, %3 : vector<8x128xf32>
    %5 = vector.broadcast %1 : vector<8x1xf32> to vector<8x128xf32>
    %6 = arith.addf %4, %5 : vector<8x128xf32>
    %7 = math.tanh %6 : vector<8x128xf32>
    %c0_4 = arith.constant 0 : index
    %c0_5 = arith.constant 0 : index
    %8 = vector.load %arg3[%c0_4, %c0_5] : memref<8x128xf32, #tpu.memory_space<vmem>>, vector<8x128xf32>
    tpu.vector_store %arg3[%c0_4, %c0_5], %7 {strides = array<i32>} : memref<8x128xf32, #tpu.memory_space<vmem>>, vector<8x128xf32>,
    return
  }
  func.func @transform_0(%arg0: i32) -> (i32, i32) {
    %c0_i32 = arith.constant 0 : i32
    %c0_i32_0 = arith.constant 0 : i32
    return %c0_i32, %arg0 : i32, i32
  }
  func.func @transform_1(%arg0: i32) -> (i32, i32) {
    %c0_i32 = arith.constant 0 : i32
    %c0_i32_0 = arith.constant 0 : i32
    %c0_i32_1 = arith.constant 0 : i32
    return %c0_i32, %c0_i32_0 : i32, i32
  }
  func.func @transform_2(%arg0: i32) -> (i32, i32) {
    %c0_i32 = arith.constant 0 : i32
    %c0_i32_0 = arith.constant 0 : i32
    return %c0_i32, %arg0 : i32, i32
  }
}

module attributes {stable_mosaic.version = 11 : i64} {
  func.func @_conv_stats_kernel(%arg0: i32, %arg1: memref<12x128xf32, #tpu.memory_space<vmem>>, %arg2: memref<8x12xf32, #tpu.memory_space<vmem>>, %arg3: memref<8x128xf32, #tpu.memory_space<vmem>>, %arg4: memref<1x8x2xf32, #tpu.memory_space<vmem>>) attributes {dimension_semantics = [#tpu.dimension_semantics<parallel>], iteration_bounds = array<i64: 1>, scalar_prefetch = 0 : i64, scratch_operands = 0 : i64, tpu.core_type = #tpu.core_type<tc>, window_params = [{transform_indices = @transform_0, window_bounds = array<i64: 12, 128>}, {pipeline_mode = #tpu.pipeline_mode<synchronous>, transform_indices = @transform_1, window_bounds = array<i64: 8, 12>}, {transform_indices = @transform_2, window_bounds = array<i64: 8, 128>}, {transform_indices = @transform_3, window_bounds = array<i64: 1, 8, 2>}]} {
    %c0 = arith.constant 0 : index
    %c0_0 = arith.constant 0 : index
    %0 = vector.load %arg2[%c0, %c0_0] : memref<8x12xf32, #tpu.memory_space<vmem>>, vector<8x12xf32>
    %c0_1 = arith.constant 0 : index
    %c0_2 = arith.constant 0 : index
    %1 = vector.load %arg1[%c0_1, %c0_2] : memref<12x128xf32, #tpu.memory_space<vmem>>, vector<12x128xf32>
    %cst = arith.constant dense<0.000000e+00> : vector<8x128xf32>
    %2 = tpu.matmul %0, %1, %cst {dimension_numbers = #tpu.dot_dimension_numbers<[1], [0], [0], [1], [0, 0, 1, 1], [], []>} : vector<8x12xf32>, vector<12x128xf32>, vector<8x128xf32> -> vector<8x128xf32>
    %c0_3 = arith.constant 0 : index
    %c0_4 = arith.constant 0 : index
    %3 = vector.load %arg3[%c0_3, %c0_4] : memref<8x128xf32, #tpu.memory_space<vmem>>, vector<8x128xf32>
    tpu.vector_store %arg3[%c0_3, %c0_4], %2 {strides = array<i32>} : memref<8x128xf32, #tpu.memory_space<vmem>>, vector<8x128xf32>,
    %cst_5 = arith.constant dense<0.000000e+00> : vector<8xf32>
    %4 = vector.multi_reduction <add>, %2, %cst_5 [1] : vector<8x128xf32> to vector<8xf32>
    %5 = vector.shape_cast %4 : vector<8xf32> to vector<8x1xf32>
    %c0_6 = arith.constant 0 : index
    %c0_7 = arith.constant 0 : index
    %c0_8 = arith.constant 0 : index
    %6 = vector.load %arg4[%c0_6, %c0_7, %c0_8] : memref<1x8x2xf32, #tpu.memory_space<vmem>>, vector<1x8x1xf32>
    %7 = vector.shape_cast %6 : vector<1x8x1xf32> to vector<8x1xf32>
    %8 = vector.shape_cast %5 : vector<8x1xf32> to vector<1x8x1xf32>
    tpu.vector_store %arg4[%c0_6, %c0_7, %c0_8], %8 {strides = array<i32>} : memref<1x8x2xf32, #tpu.memory_space<vmem>>, vector<1x8x1xf32>,
    %9 = arith.mulf %2, %2 : vector<8x128xf32>
    %cst_9 = arith.constant dense<0.000000e+00> : vector<8xf32>
    %10 = vector.multi_reduction <add>, %9, %cst_9 [1] : vector<8x128xf32> to vector<8xf32>
    %11 = vector.shape_cast %10 : vector<8xf32> to vector<8x1xf32>
    %c0_10 = arith.constant 0 : index
    %c0_11 = arith.constant 0 : index
    %c1 = arith.constant 1 : index
    %12 = vector.load %arg4[%c0_10, %c0_11, %c1] : memref<1x8x2xf32, #tpu.memory_space<vmem>>, vector<1x8x1xf32>
    %13 = vector.shape_cast %12 : vector<1x8x1xf32> to vector<8x1xf32>
    %14 = vector.shape_cast %11 : vector<8x1xf32> to vector<1x8x1xf32>
    tpu.vector_store %arg4[%c0_10, %c0_11, %c1], %14 {strides = array<i32>} : memref<1x8x2xf32, #tpu.memory_space<vmem>>, vector<1x8x1xf32>,
    return
  }
  func.func @transform_0(%arg0: i32) -> (i32, i32) {
    %c0_i32 = arith.constant 0 : i32
    %c0_i32_0 = arith.constant 0 : i32
    return %c0_i32, %arg0 : i32, i32
  }
  func.func @transform_1(%arg0: i32) -> (i32, i32) {
    %c0_i32 = arith.constant 0 : i32
    %c0_i32_0 = arith.constant 0 : i32
    %c0_i32_1 = arith.constant 0 : i32
    return %c0_i32, %c0_i32_0 : i32, i32
  }
  func.func @transform_2(%arg0: i32) -> (i32, i32) {
    %c0_i32 = arith.constant 0 : i32
    %c0_i32_0 = arith.constant 0 : i32
    return %c0_i32, %arg0 : i32, i32
  }
  func.func @transform_3(%arg0: i32) -> (i32, i32, i32) {
    %c0_i32 = arith.constant 0 : i32
    %c0_i32_0 = arith.constant 0 : i32
    %c0_i32_1 = arith.constant 0 : i32
    return %arg0, %c0_i32, %c0_i32_0 : i32, i32, i32
  }
}

</mosaic_0001>

<llo_original>
// kernel: conv_tanh_block.3
$region0: #{conv_tanh_block.3}
  #allocation0 [shape = 'u32[]', space=smem, size = 0x4, offset = 0x4, fixed_abs, tag = 'smem constant byte address 0x4 - core index']
  #allocation1 [shape = 'u32[72,128]{1,0:T(1,128)}', space=vmem, size = 0x9000, scoped, tag = 'internal scratch']
  %s0 = inlined_call_operand.vmem [shape: f32[8,128], index: 0, kind: input, shape index: {}]
  %s1 = inlined_call_operand.vmem [shape: f32[8,2], index: 1, kind: input, shape index: {}]
  %s2 = inlined_call_operand.vmem [shape: f32[8,128], index: 2, kind: output, shape index: {}]
  %s3 = sld [smem:[#allocation0]]
  $region18: #{conv_tanh_block.3} parent=0
    _
  %s5 = ssub.s32 1, %s3
  %s6 = scalar_select 0, %s5, %s3
  // Predicated region
  $region2: #{conv_tanh_block.3} parent=0 // pred_check
    _
  $region3: #{conv_tanh_block.3} parent=0 // pred_check_branch
    %8 = sbr.rel (0) target = $region5
  $region4: #{conv_tanh_block.3} parent=0 // pred_region
    _
  $region5: #{conv_tanh_block.3} parent=0 // pred_fallthru
    _
  // Predicated region
  $region6: #{conv_tanh_block.3} parent=0 // pred_check
    _
  $region7: #{conv_tanh_block.3} parent=0 // pred_check_branch
    %10 = sbr.rel (0) target = $region9
  $region8: #{conv_tanh_block.3} parent=0 // pred_region
    _
  $region9: #{conv_tanh_block.3} parent=0 // pred_fallthru
    _
  %v11 = vld [vmem:[%s1] sm:$0xff]
  %v12 = vld [vmem:[%s0] sm:$0xff]
  %14 = vset.pattern.permute.xlu0 0
  %15 = vperm.xlu0 %14, %v11
  %v16 = vpop.permute.xlu0 %15
  %v18 = vmul.f32 %v12, %v16
  %19 = vset.pattern.permute.xlu0 1
  %20 = vperm.xlu0 %19, %v11
  %v21 = vpop.permute.xlu0 %20
  %v23 = vadd.f32 %v18, %v21
  %v24 = vtanh.pop %v23
  %25 = vst [vmem:[%s2] sm:$0xff] %v24
  // Predicated region
  $region10: #{conv_tanh_block.3} parent=0 // pred_check
    _
  $region11: #{conv_tanh_block.3} parent=0 // pred_check_branch
    %27 = sbr.rel (0) target = $region13
  $region12: #{conv_tanh_block.3} parent=0 // pred_region
    _
  $region13: #{conv_tanh_block.3} parent=0 // pred_fallthru
    _
  // Predicated region
  $region14: #{conv_tanh_block.3} parent=0 // pred_check
    _
  $region15: #{conv_tanh_block.3} parent=0 // pred_check_branch
    %29 = sbr.rel (0) target = $region17
  $region16: #{conv_tanh_block.3} parent=0 // pred_region
    _
  $region17: #{conv_tanh_block.3} parent=0 // pred_fallthru
    _

// kernel: conv_tanh_block.2
$region0: #{conv_tanh_block.2}
  #allocation0 [shape = 'u32[]', space=smem, size = 0x4, offset = 0x4, fixed_abs, tag = 'smem constant byte address 0x4 - core index']
  #allocation1 [shape = 'u32[72,128]{1,0:T(1,128)}', space=vmem, size = 0x9000, scoped, tag = 'internal scratch']
  %s0 = inlined_call_operand.vmem [shape: f32[12,128], index: 0, kind: input, shape index: {}]
  %s1 = inlined_call_operand.vmem [shape: f32[8,12], index: 1, kind: input, shape index: {}]
  %s2 = inlined_call_operand.vmem [shape: f32[8,128], index: 2, kind: output, shape index: {0}]
  %s3 = inlined_call_operand.vmem [shape: f32[1,8,2], index: 3, kind: output, shape index: {1}]
  %4 = xla_tuple %s2, %s3
  %s5 = sld [smem:[#allocation0]]
  $region26: #{conv_tanh_block.2} parent=0
    _
  %s7 = ssub.s32 1, %s5
  %s8 = scalar_select 0, %s7, %s5
  // Predicated region
  $region2: #{conv_tanh_block.2} parent=0 // pred_check
    _
  $region3: #{conv_tanh_block.2} parent=0 // pred_check_branch
    %10 = sbr.rel (0) target = $region5
  $region4: #{conv_tanh_block.2} parent=0 // pred_region
    _
  $region5: #{conv_tanh_block.2} parent=0 // pred_fallthru
    _
  // Predicated region
  $region6: #{conv_tanh_block.2} parent=0 // pred_check
    _
  $region7: #{conv_tanh_block.2} parent=0 // pred_check_branch
    %12 = sbr.rel (0) target = $region9
  $region8: #{conv_tanh_block.2} parent=0 // pred_region
    _
  $region9: #{conv_tanh_block.2} parent=0 // pred_fallthru
    _
  %v13 = vld [vmem:[%s1] sm:$0xff]
  %v14 = vld [vmem:[%s0] sm:$0xff]
  %v15 = vld [vmem:[%s0 + $0x8] sm:$0xf]
  %vm16 = vcmask 97280
  %v18 = vsel %vm16, %v13, 0
  %vm20 = vcmask 1043456
  %v22 = vsel %vm20, %v15, 0
  %24 = vmatpush.msra.mxu0 0.0
  %25 = vmatpush.msra.mxu0 0.0
  %26 = vmatpush.msra.mxu0 0.0
  %27 = vmatpush.msra.mxu0 0.0
  %28 = vmatpush.msra.mxu0 0.0
  %29 = vmatpush.msra.mxu0 0.0
  %30 = vmatpush.msra.mxu0 0.0
  %31 = vmatpush.msra.mxu0 0.0
  %32 = vmatpush.msra.mxu0 0.0
  %33 = vmatpush.msra.mxu0 0.0
  %34 = vmatpush.msra.mxu0 0.0
  %35 = vmatpush.msra.mxu0 0.0
  %36 = vmatpush.msra.mxu0 0.0
  %37 = vmatpush.msra.mxu0 0.0
  %38 = vmatpush.msra.mxu0 %v22
  %39 = vmatpush.msra.mxu0 %v14
  %40 = vmatmul.f32.gmra.mxu0 %v18
  %v41 = vpop.f32.mrf.mxu0
  %v42 = vadd.f32 0.0, %v41
  %43 = vdwg.mxu0
  %44 = vst [vmem:[%s2] sm:$0xff] %v42
  %45 = vadd.xlane.f32.xlu0 %v42
  %v46 = vpop.xlane.xlu0 %45
  %vm47 = vcmask 7168
  %48 = vst.msk [vmem:[%s3] sm:$0xff] %vm47, %v46
  %v49 = vmul.f32 %v42, %v42
  %50 = vadd.xlane.f32.xlu0 %v49
  %v51 = vpop.xlane.xlu0 %50
  %vm52 = vcmask 15368
  %53 = vst.msk [vmem:[%s3] sm:$0xff] %vm52, %v51
  // Predicated region
  $region10: #{conv_tanh_block.2} parent=0 // pred_check
    _
  $region11: #{conv_tanh_block.2} parent=0 // pred_check_branch
    %55 = sbr.rel (0) target = $region13
  $region12: #{conv_tanh_block.2} parent=0 // pred_region
    _
  $region13: #{conv_tanh_block.2} parent=0 // pred_fallthru
    _
  // Predicated region
  $region14: #{conv_tanh_block.2} parent=0 // pred_check
    _
  $region15: #{conv_tanh_block.2} parent=0 // pred_check_branch
    %57 = sbr.rel (0) target = $region17
  $region16: #{conv_tanh_block.2} parent=0 // pred_region
    _
  $region17: #{conv_tanh_block.2} parent=0 // pred_fallthru
    _
  // Predicated region
  $region18: #{conv_tanh_block.2} parent=0 // pred_check
    _
  $region19: #{conv_tanh_block.2} parent=0 // pred_check_branch
    %59 = sbr.rel (0) target = $region21
  $region20: #{conv_tanh_block.2} parent=0 // pred_region
    _
  $region21: #{conv_tanh_block.2} parent=0 // pred_fallthru
    _
  // Predicated region
  $region22: #{conv_tanh_block.2} parent=0 // pred_check
    _
  $region23: #{conv_tanh_block.2} parent=0 // pred_check_branch
    %61 = sbr.rel (0) target = $region25
  $region24: #{conv_tanh_block.2} parent=0 // pred_region
    _
  $region25: #{conv_tanh_block.2} parent=0 // pred_fallthru
    _

</llo_original>
